<compile_context>
chip_gen: v7x
topology: tpu7x:2x2x1
jax: 0.10.0
libtpu: 0.0.40
codegen_flags: <defaults>
</compile_context>

<pallas_src>
import numpy as np
import jax
import jax.numpy as jnp
from jax.experimental import pallas as pl
from jax.experimental.pallas import tpu as pltpu


def _fusion_loss_kernel(dims_ref, preds_t_ref, targets_ref, coords_ref, out_ref):
    n_valid = dims_ref[0]          # number of real detections
    m_valid = dims_ref[1]          # number of real targets
    tile = pl.program_id(0)

    pt = preds_t_ref[...].astype(jnp.float32)     # (7, TILE_N)  lane-dense preds
    t = targets_ref[...].astype(jnp.float32)      # (M_pad, 7)   targets on sublanes
    coords = coords_ref[...].astype(jnp.float32)  # (8, M_pad)   rows 0..3 = x1,y1,x2,y2
    m_pad = t.shape[0]
    tile_n = pt.shape[1]

    # pred rows, (1, TILE_N): broadcast along the target/sublane axis
    px1 = pt[0:1, :]
    py1 = pt[1:2, :]
    px2 = pt[2:3, :]
    py2 = pt[3:4, :]
    pconf = pt[4:5, :]
    pcls = pt[6:7, :]

    # target columns, (M_pad, 1): broadcast along the detection/lane axis
    tx1 = t[:, 0:1]
    ty1 = t[:, 1:2]
    tx2 = t[:, 2:3]
    ty2 = t[:, 3:4]
    tcls = t[:, 6:7]

    # ---- pairwise IoU test (bb_intersection_over_union, +1 pixel convention) ----
    xA = jnp.maximum(px1, tx1)                                   # (M_pad, TILE_N)
    yA = jnp.maximum(py1, ty1)
    xB = jnp.minimum(px2, tx2)
    yB = jnp.minimum(py2, ty2)
    inter = jnp.maximum(0.0, xB - xA + 1.0) * jnp.maximum(0.0, yB - yA + 1.0)
    areaA = (px2 - px1 + 1.0) * (py2 - py1 + 1.0)                # (1, TILE_N)
    areaB = (tx2 - tx1 + 1.0) * (ty2 - ty1 + 1.0)                # (M_pad, 1)

    tgt_row = jax.lax.broadcasted_iota(jnp.int32, (m_pad, tile_n), 0)
    # divide-free:  inter/(areaA+areaB-inter) > 0.5  <=>  3*inter > areaA+areaB
    eligible = (3.0 * inter > areaA + areaB) & (pcls == tcls) & (tgt_row < m_valid)

    # ---- "first eligible target" (emulates the inner-loop break), int32 ----
    first_idx = jnp.min(jnp.where(eligible, tgt_row, m_pad),
                        axis=0, keepdims=True)                   # (1, TILE_N)
    matched = first_idx < m_pad                                  # (1, TILE_N) bool
    sel = (tgt_row == first_idx).astype(jnp.float32)             # (M_pad, TILE_N) one-hot

    # ---- gather matched target box on the (idle) MXU: (8,M_pad) @ (M_pad,TILE_N) ----
    gathered = jnp.dot(coords, sel, preferred_element_type=jnp.float32)  # (8, TILE_N)

    # ---- SmoothL1 (beta=1, reduction='mean' over the 4 coords) ----
    d = pt[0:4, :] - gathered[0:4, :]                            # (4, TILE_N)
    ad = jnp.abs(d)
    sl = jnp.where(ad < 1.0, 0.5 * d * d, ad - 0.5)
    reg = 0.25 * jnp.sum(sl, axis=0, keepdims=True)              # (1, TILE_N)

    # ---- single fused log: matched -> -log(conf), unmatched -> -log(1-conf) ----
    log_arg = jnp.where(matched, pconf, 1.0 - pconf)
    per_pred = jnp.where(matched, reg, 0.0) - jnp.log(log_arg)   # (1, TILE_N)

    # mask padded / out-of-range detection lanes of the (ragged) last tile
    lane = jax.lax.broadcasted_iota(jnp.int32, (1, tile_n), 1)
    lane_valid = (tile * tile_n + lane) < n_valid
    per_pred = jnp.where(lane_valid, per_pred, 0.0)

    # ---- in-kernel partial reduction to one lane-dense (1, 128) slab per tile ----
    partial = per_pred[:, 0:128]
    for c in range(1, tile_n // 128):
        partial = partial + per_pred[:, c * 128:(c + 1) * 128]
    out_ref[...] = partial


def _pick_tile_n(n, requested):
    """Multiple of 128, capped for vreg pressure, >=2 tiles when there is work."""
    t = max(128, (min(int(requested), 1024) // 128) * 128)
    t = min(t, pl.cdiv(n, 128) * 128)            # don't over-pad tiny problems
    if n > 128 and pl.cdiv(n, t) < 2:            # give 2-TC chips (v7x) >= 2 tiles
        t = max(128, pl.cdiv(pl.cdiv(n, 2), 128) * 128)
    return t


def fusion_loss(preds, targets, *, tile_n=512):
    """preds: (1, N, 7) f32, targets: (M, 7) f32 -> scalar f32 loss."""
    preds0 = jnp.asarray(preds)[0].astype(jnp.float32)   # (N, 7)
    targets = jnp.asarray(targets).astype(jnp.float32)   # (M, 7)
    n = preds0.shape[0]
    m = targets.shape[0]
    if n == 0:
        return jnp.float32(0.0)

    tile_n = _pick_tile_n(n, tile_n)
    num_tiles = pl.cdiv(n, tile_n)
    m_pad = max(8, pl.cdiv(max(m, 1), 8) * 8)

    # layout plumbing: N on lanes, M on sublanes.  No zero-pad copy of the big
    # preds array — the ragged last block is handled by Pallas + the lane mask.
    if n < 128:
        preds_t = jnp.zeros((7, 128), jnp.float32).at[:, :n].set(preds0.T)
    else:
        preds_t = preds0.T                                # (7, N)

    if m > 0:
        targets_pad = jnp.zeros((m_pad, 7), jnp.float32).at[:m, :].set(targets)
    else:
        targets_pad = jnp.zeros((m_pad, 7), jnp.float32)
    # (8, M_pad) coordinate matrix for the MXU gather (rows 4..7 are zero)
    coords_t = jnp.zeros((8, m_pad), jnp.float32).at[0:4, :].set(targets_pad[:, 0:4].T)

    dims = jnp.array([n, m], dtype=jnp.int32)             # scalar-prefetch: valid extents

    grid_spec = pltpu.PrefetchScalarGridSpec(
        num_scalar_prefetch=1,
        grid=(num_tiles,),
        in_specs=[
            pl.BlockSpec((7, tile_n), lambda i, dims: (0, i)),     # preds tile
            pl.BlockSpec((m_pad, 7), lambda i, dims: (0, 0)),      # targets (full, resident)
            pl.BlockSpec((8, m_pad), lambda i, dims: (0, 0)),      # target coords (full)
        ],
        out_specs=pl.BlockSpec((1, 128), lambda i, dims: (0, i)),  # per-tile partial
    )

    partials = pl.pallas_call(
        _fusion_loss_kernel,
        out_shape=jax.ShapeDtypeStruct((1, num_tiles * 128), jnp.float32),
        grid_spec=grid_spec,
        compiler_params=pltpu.CompilerParams(
            dimension_semantics=("parallel",)),   # independent tiles -> 2 TCs on v7x
    )(dims, preds_t, targets_pad, coords_t)

    # tiny epilogue: num_tiles*128 floats instead of a (1, N_pad) HBM round trip
    return jnp.sum(partials)


# ---------------- pure-Python reference (mirrors the PyTorch module) ----------------
def _ref_iou(a, b):
    xA = max(a[0], b[0]); yA = max(a[1], b[1])
    xB = min(a[2], b[2]); yB = min(a[3], b[3])
    inter = max(0.0, xB - xA + 1) * max(0.0, yB - yA + 1)
    areaA = (a[2] - a[0] + 1) * (a[3] - a[1] + 1)
    areaB = (b[2] - b[0] + 1) * (b[3] - b[1] + 1)
    return inter / float(areaA + areaB - inter)


def _ref_fusion_loss(preds, targets):
    preds = np.asarray(preds[0], dtype=np.float64)
    targets = np.asarray(targets, dtype=np.float64)
    loss = 0.0
    for pred in preds:
        matched = False
        for target in targets:
            iou = _ref_iou(pred[0:4], target[0:4])
            if iou > 0.5 and pred[6] == target[6]:
                matched = True
                d = pred[0:4] - target[0:4]
                ad = np.abs(d)
                reg = np.mean(np.where(ad < 1.0, 0.5 * d * d, ad - 0.5))
                loss += reg + (-np.log(pred[4]))
                break
        if not matched:
            loss += -np.log(-pred[4] + 1.0)
    return loss


def _make_case(key, n_match, n_unmatched, m):
    """Deterministic targets + (matched-jitter | far-unmatched) preds."""
    k1, k2, k3, k4, k5, k6, k7 = jax.random.split(key, 7)
    t_xy = jax.random.uniform(k1, (m, 2), minval=0.0, maxval=20.0)
    t_wh = jax.random.uniform(k2, (m, 2), minval=5.0, maxval=10.0)
    t_cls = jax.random.randint(k3, (m, 1), 0, 3).astype(jnp.float32)
    targets = jnp.concatenate(
        [t_xy, t_xy + t_wh, jnp.ones((m, 1)), jnp.zeros((m, 1)), t_cls], axis=1)

    reps = max(1, n_match // m)
    base = jnp.tile(targets, (reps + 1, 1))[:n_match]
    jitter = jax.random.uniform(k4, (n_match, 4), minval=-0.4, maxval=0.4)
    conf_m = jax.random.uniform(k5, (n_match, 1), minval=0.3, maxval=0.9)
    p_match = jnp.concatenate(
        [base[:, 0:4] + jitter, conf_m, jnp.zeros((n_match, 1)), base[:, 6:7]], axis=1)

    far_xy = jax.random.uniform(k6, (n_unmatched, 2), minval=100.0, maxval=200.0)
    far_wh = jnp.full((n_unmatched, 2), 6.0)
    conf_u = jax.random.uniform(k7, (n_unmatched, 1), minval=0.1, maxval=0.5)
    p_un = jnp.concatenate(
        [far_xy, far_xy + far_wh, conf_u, jnp.zeros((n_unmatched, 1)),
         jnp.zeros((n_unmatched, 1))], axis=1)

    preds0 = jnp.concatenate([p_match, p_un], axis=0)
    return preds0[None, :, :], targets


if __name__ == "__main__":
    key = jax.random.PRNGKey(0)
    k_small, k_big = jax.random.split(key)

    # small case: 4 matched + 2 unmatched preds, 4 targets (single tile, N < 128)
    preds_s, targets_s = _make_case(k_small, n_match=4, n_unmatched=2, m=4)
    loss_s = jax.block_until_ready(fusion_loss(preds_s, targets_s))
    ref_s = _ref_fusion_loss(np.asarray(preds_s), np.asarray(targets_s))
    assert np.allclose(float(loss_s), ref_s, rtol=1e-4, atol=1e-3), (float(loss_s), ref_s)

    # larger case: 300 preds, 5 targets
    preds_b, targets_b = _make_case(k_big, n_match=200, n_unmatched=100, m=5)
    ref_b = _ref_fusion_loss(np.asarray(preds_b), np.asarray(targets_b))

    # default tile picker -> tile_n=256, 2-tile parallel grid with a ragged last tile
    loss_b = jax.block_until_ready(fusion_loss(preds_b, targets_b))
    assert np.allclose(float(loss_b), ref_b, rtol=1e-4, atol=1e-3), (float(loss_b), ref_b)

    # explicit tile_n=128 -> 3-tile grid (exercises multi-chunk / odd tile counts)
    loss_b2 = jax.block_until_ready(fusion_loss(preds_b, targets_b, tile_n=128))
    assert np.allclose(float(loss_b2), ref_b, rtol=1e-4, atol=1e-3), (float(loss_b2), ref_b)

    print("KERNEL_OK")
</pallas_src>

<mosaic_0001>
module attributes {stable_mosaic.version = 11 : i64} {
  func.func @_fusion_loss_kernel(%arg0: i32, %arg1: memref<2xi32, #tpu.memory_space<smem>>, %arg2: memref<7x128xf32, #tpu.memory_space<vmem>>, %arg3: memref<8x7xf32, #tpu.memory_space<vmem>>, %arg4: memref<8x8xf32, #tpu.memory_space<vmem>>, %arg5: memref<1x128xf32, #tpu.memory_space<vmem>>) attributes {dimension_semantics = [#tpu.dimension_semantics<parallel>], iteration_bounds = array<i64: 1>, scalar_prefetch = 1 : i64, scratch_operands = 0 : i64, tpu.core_type = #tpu.core_type<tc>, window_params = [{transform_indices = @transform_0, window_bounds = array<i64: 7, 128>}, {pipeline_mode = #tpu.pipeline_mode<synchronous>, transform_indices = @transform_1, window_bounds = array<i64: 8, 7>}, {pipeline_mode = #tpu.pipeline_mode<synchronous>, transform_indices = @transform_2, window_bounds = array<i64: 8, 8>}, {transform_indices = @transform_3, window_bounds = array<i64: 1, 128>}]} {
    %c0 = arith.constant 0 : index
    %0 = memref.load %arg1[%c0] : memref<2xi32, #tpu.memory_space<smem>>
    %c1 = arith.constant 1 : index
    %1 = memref.load %arg1[%c1] : memref<2xi32, #tpu.memory_space<smem>>
    %c0_0 = arith.constant 0 : index
    %c0_1 = arith.constant 0 : index
    %2 = vector.load %arg2[%c0_0, %c0_1] : memref<7x128xf32, #tpu.memory_space<vmem>>, vector<7x128xf32>
    %c0_2 = arith.constant 0 : index
    %c0_3 = arith.constant 0 : index
    %3 = vector.load %arg3[%c0_2, %c0_3] : memref<8x7xf32, #tpu.memory_space<vmem>>, vector<8x7xf32>
    %c0_4 = arith.constant 0 : index
    %c0_5 = arith.constant 0 : index
    %4 = vector.load %arg4[%c0_4, %c0_5] : memref<8x8xf32, #tpu.memory_space<vmem>>, vector<8x8xf32>
    %5 = vector.extract_strided_slice %2 {offsets = [0, 0], sizes = [1, 128], strides = [1, 1]} : vector<7x128xf32> to vector<1x128xf32>
    %6 = vector.extract_strided_slice %2 {offsets = [1, 0], sizes = [1, 128], strides = [1, 1]} : vector<7x128xf32> to vector<1x128xf32>
    %7 = vector.extract_strided_slice %2 {offsets = [2, 0], sizes = [1, 128], strides = [1, 1]} : vector<7x128xf32> to vector<1x128xf32>
    %8 = vector.extract_strided_slice %2 {offsets = [3, 0], sizes = [1, 128], strides = [1, 1]} : vector<7x128xf32> to vector<1x128xf32>
    %9 = vector.extract_strided_slice %2 {offsets = [4, 0], sizes = [1, 128], strides = [1, 1]} : vector<7x128xf32> to vector<1x128xf32>
    %10 = vector.extract_strided_slice %2 {offsets = [6, 0], sizes = [1, 128], strides = [1, 1]} : vector<7x128xf32> to vector<1x128xf32>
    %11 = vector.extract_strided_slice %3 {offsets = [0, 0], sizes = [8, 1], strides = [1, 1]} : vector<8x7xf32> to vector<8x1xf32>
    %12 = vector.extract_strided_slice %3 {offsets = [0, 1], sizes = [8, 1], strides = [1, 1]} : vector<8x7xf32> to vector<8x1xf32>
    %13 = vector.extract_strided_slice %3 {offsets = [0, 2], sizes = [8, 1], strides = [1, 1]} : vector<8x7xf32> to vector<8x1xf32>
    %14 = vector.extract_strided_slice %3 {offsets = [0, 3], sizes = [8, 1], strides = [1, 1]} : vector<8x7xf32> to vector<8x1xf32>
    %15 = vector.extract_strided_slice %3 {offsets = [0, 6], sizes = [8, 1], strides = [1, 1]} : vector<8x7xf32> to vector<8x1xf32>
    %16 = vector.broadcast %5 : vector<1x128xf32> to vector<8x128xf32>
    %17 = vector.broadcast %11 : vector<8x1xf32> to vector<8x128xf32>
    %18 = arith.maximumf %16, %17 : vector<8x128xf32>
    %19 = vector.broadcast %6 : vector<1x128xf32> to vector<8x128xf32>
    %20 = vector.broadcast %12 : vector<8x1xf32> to vector<8x128xf32>
    %21 = arith.maximumf %19, %20 : vector<8x128xf32>
    %22 = vector.broadcast %7 : vector<1x128xf32> to vector<8x128xf32>
    %23 = vector.broadcast %13 : vector<8x1xf32> to vector<8x128xf32>
    %24 = arith.minimumf %22, %23 : vector<8x128xf32>
    %25 = vector.broadcast %8 : vector<1x128xf32> to vector<8x128xf32>
    %26 = vector.broadcast %14 : vector<8x1xf32> to vector<8x128xf32>
    %27 = arith.minimumf %25, %26 : vector<8x128xf32>
    %28 = arith.subf %24, %18 : vector<8x128xf32>
    %cst = arith.constant 1.000000e+00 : f32
    %29 = vector.broadcast %cst : f32 to vector<8x128xf32>
    %30 = arith.addf %28, %29 : vector<8x128xf32>
    %cst_6 = arith.constant 0.000000e+00 : f32
    %31 = vector.broadcast %cst_6 : f32 to vector<8x128xf32>
    %32 = arith.maximumf %31, %30 : vector<8x128xf32>
    %33 = arith.subf %27, %21 : vector<8x128xf32>
    %cst_7 = arith.constant 1.000000e+00 : f32
    %34 = vector.broadcast %cst_7 : f32 to vector<8x128xf32>
    %35 = arith.addf %33, %34 : vector<8x128xf32>
    %cst_8 = arith.constant 0.000000e+00 : f32
    %36 = vector.broadcast %cst_8 : f32 to vector<8x128xf32>
    %37 = arith.maximumf %36, %35 : vector<8x128xf32>
    %38 = arith.mulf %32, %37 : vector<8x128xf32>
    %39 = arith.subf %7, %5 : vector<1x128xf32>
    %cst_9 = arith.constant 1.000000e+00 : f32
    %40 = vector.broadcast %cst_9 : f32 to vector<1x128xf32>
    %41 = arith.addf %39, %40 : vector<1x128xf32>
    %42 = arith.subf %8, %6 : vector<1x128xf32>
    %cst_10 = arith.constant 1.000000e+00 : f32
    %43 = vector.broadcast %cst_10 : f32 to vector<1x128xf32>
    %44 = arith.addf %42, %43 : vector<1x128xf32>
    %45 = arith.mulf %41, %44 : vector<1x128xf32>
    %46 = arith.subf %13, %11 : vector<8x1xf32>
    %cst_11 = arith.constant 1.000000e+00 : f32
    %47 = vector.broadcast %cst_11 : f32 to vector<8x1xf32>
    %48 = arith.addf %46, %47 : vector<8x1xf32>
    %49 = arith.subf %14, %12 : vector<8x1xf32>
    %cst_12 = arith.constant 1.000000e+00 : f32
    %50 = vector.broadcast %cst_12 : f32 to vector<8x1xf32>
    %51 = arith.addf %49, %50 : vector<8x1xf32>
    %52 = arith.mulf %48, %51 : vector<8x1xf32>
    %53 = tpu.iota {dimensions = array<i32: 0>} : vector<8x128xi32>
    %cst_13 = arith.constant 3.000000e+00 : f32
    %54 = vector.broadcast %cst_13 : f32 to vector<8x128xf32>
    %55 = arith.mulf %54, %38 : vector<8x128xf32>
    %56 = vector.broadcast %45 : vector<1x128xf32> to vector<8x128xf32>
    %57 = vector.broadcast %52 : vector<8x1xf32> to vector<8x128xf32>
    %58 = arith.addf %56, %57 : vector<8x128xf32>
    %59 = arith.cmpf ogt, %55, %58 : vector<8x128xf32>
    %60 = vector.broadcast %10 : vector<1x128xf32> to vector<8x128xf32>
    %61 = vector.broadcast %15 : vector<8x1xf32> to vector<8x128xf32>
    %62 = arith.cmpf oeq, %60, %61 : vector<8x128xf32>
    %63 = arith.andi %59, %62 : vector<8x128xi1>
    %64 = vector.broadcast %1 : i32 to vector<8x128xi32>
    %65 = arith.cmpi slt, %53, %64 : vector<8x128xi32>
    %66 = arith.andi %63, %65 : vector<8x128xi1>
    %c8_i32 = arith.constant 8 : i32
    %67 = vector.broadcast %c8_i32 : i32 to vector<8x128xi32>
    %68 = arith.select %66, %53, %67 : vector<8x128xi1>, vector<8x128xi32>
    %cst_14 = arith.constant dense<2147483647> : vector<128xi32>
    %69 = vector.multi_reduction <minsi>, %68, %cst_14 [0] : vector<8x128xi32> to vector<128xi32>
    %70 = vector.shape_cast %69 : vector<128xi32> to vector<1x128xi32>
    %c8_i32_15 = arith.constant 8 : i32
    %71 = vector.broadcast %c8_i32_15 : i32 to vector<1x128xi32>
    %72 = arith.cmpi slt, %70, %71 : vector<1x128xi32>
    %73 = vector.broadcast %70 : vector<1x128xi32> to vector<8x128xi32>
    %74 = arith.cmpi eq, %53, %73 : vector<8x128xi32>
    %75 = arith.extui %74 : vector<8x128xi1> to vector<8x128xi32>
    %76 = arith.sitofp %75 : vector<8x128xi32> to vector<8x128xf32>
    %cst_16 = arith.constant dense<0.000000e+00> : vector<8x128xf32>
    %77 = tpu.matmul %4, %76, %cst_16 {dimension_numbers = #tpu.dot_dimension_numbers<[1], [0], [0], [1], [0, 0, 1, 1], [], []>} : vector<8x8xf32>, vector<8x128xf32>, vector<8x128xf32> -> vector<8x128xf32>
    %78 = vector.extract_strided_slice %2 {offsets = [0, 0], sizes = [4, 128], strides = [1, 1]} : vector<7x128xf32> to vector<4x128xf32>
    %79 = vector.extract_strided_slice %77 {offsets = [0, 0], sizes = [4, 128], strides = [1, 1]} : vector<8x128xf32> to vector<4x128xf32>
    %80 = arith.subf %78, %79 : vector<4x128xf32>
    %81 = math.absf %80 : vector<4x128xf32>
    %cst_17 = arith.constant 1.000000e+00 : f32
    %82 = vector.broadcast %cst_17 : f32 to vector<4x128xf32>
    %83 = arith.cmpf olt, %81, %82 : vector<4x128xf32>
    %cst_18 = arith.constant 5.000000e-01 : f32
    %84 = vector.broadcast %cst_18 : f32 to vector<4x128xf32>
    %85 = arith.mulf %84, %80 : vector<4x128xf32>
    %86 = arith.mulf %85, %80 : vector<4x128xf32>
    %cst_19 = arith.constant 5.000000e-01 : f32
    %87 = vector.broadcast %cst_19 : f32 to vector<4x128xf32>
    %88 = arith.subf %81, %87 : vector<4x128xf32>
    %89 = arith.select %83, %86, %88 : vector<4x128xi1>, vector<4x128xf32>
    %cst_20 = arith.constant dense<0.000000e+00> : vector<128xf32>
    %90 = vector.multi_reduction <add>, %89, %cst_20 [0] : vector<4x128xf32> to vector<128xf32>
    %91 = vector.shape_cast %90 : vector<128xf32> to vector<1x128xf32>
    %cst_21 = arith.constant 2.500000e-01 : f32
    %92 = vector.broadcast %cst_21 : f32 to vector<1x128xf32>
    %93 = arith.mulf %92, %91 : vector<1x128xf32>
    %cst_22 = arith.constant 1.000000e+00 : f32
    %94 = vector.broadcast %cst_22 : f32 to vector<1x128xf32>
    %95 = arith.subf %94, %9 : vector<1x128xf32>
    %96 = arith.select %72, %9, %95 : vector<1x128xi1>, vector<1x128xf32>
    %cst_23 = arith.constant 0.000000e+00 : f32
    %97 = vector.broadcast %cst_23 : f32 to vector<1x128xf32>
    %98 = arith.select %72, %93, %97 : vector<1x128xi1>, vector<1x128xf32>
    %99 = math.log %96 : vector<1x128xf32>
    %100 = arith.subf %98, %99 : vector<1x128xf32>
    %101 = tpu.iota {dimensions = array<i32: 1>} : vector<1x128xi32>
    %c128_i32 = arith.constant 128 : i32
    %102 = arith.muli %arg0, %c128_i32 : i32
    %103 = vector.broadcast %102 : i32 to vector<1x128xi32>
    %104 = arith.addi %103, %101 : vector<1x128xi32>
    %105 = vector.broadcast %0 : i32 to vector<1x128xi32>
    %106 = arith.cmpi slt, %104, %105 : vector<1x128xi32>
    %cst_24 = arith.constant 0.000000e+00 : f32
    %107 = vector.broadcast %cst_24 : f32 to vector<1x128xf32>
    %108 = arith.select %106, %100, %107 : vector<1x128xi1>, vector<1x128xf32>
    %c0_25 = arith.constant 0 : index
    %c0_26 = arith.constant 0 : index
    %109 = vector.load %arg5[%c0_25, %c0_26] : memref<1x128xf32, #tpu.memory_space<vmem>>, vector<1x128xf32>
    tpu.vector_store %arg5[%c0_25, %c0_26], %108 {strides = array<i32>} : memref<1x128xf32, #tpu.memory_space<vmem>>, vector<1x128xf32>,
    return
  }
  func.func @transform_0(%arg0: i32, %arg1: memref<2xi32, #tpu.memory_space<smem>>) -> (i32, i32) {
    %c0_i32 = arith.constant 0 : i32
    %c0_i32_0 = arith.constant 0 : i32
    return %c0_i32, %arg0 : i32, i32
  }
  func.func @transform_1(%arg0: i32, %arg1: memref<2xi32, #tpu.memory_space<smem>>) -> (i32, i32) {
    %c0_i32 = arith.constant 0 : i32
    %c0_i32_0 = arith.constant 0 : i32
    %c0_i32_1 = arith.constant 0 : i32
    return %c0_i32, %c0_i32_0 : i32, i32
  }
  func.func @transform_2(%arg0: i32, %arg1: memref<2xi32, #tpu.memory_space<smem>>) -> (i32, i32) {
    %c0_i32 = arith.constant 0 : i32
    %c0_i32_0 = arith.constant 0 : i32
    %c0_i32_1 = arith.constant 0 : i32
    return %c0_i32, %c0_i32_0 : i32, i32
  }
  func.func @transform_3(%arg0: i32, %arg1: memref<2xi32, #tpu.memory_space<smem>>) -> (i32, i32) {
    %c0_i32 = arith.constant 0 : i32
    %c0_i32_0 = arith.constant 0 : i32
    return %c0_i32, %arg0 : i32, i32
  }
}

</mosaic_0001>

<llo_original>
// kernel: tpu_custom_call.1
$region0: #{tpu_custom_call.1}
  #allocation0 [shape = 'u32[]', space=smem, size = 0x4, offset = 0x4, fixed_abs, tag = 'smem constant byte address 0x4 - core index']
  #allocation1 [shape = 'u32[144,128]{1,0:T(1,128)}', space=vmem, size = 0x12000, scoped, tag = 'internal scratch']
  #allocation2 [shape = 's32[1]{0}', space=sflag, size = 0x4, scoped, tag = 'scoped memory for tpu_custom_call.1']
  #allocation3 [shape = 'u8[512]{0}', space=smem, size = 0x200, scoped, tag = 'prefetched SMEM operand 0']
  %s0 = inlined_call_operand.hbm [shape: s32[2], index: 0, kind: input, shape index: {}]
  %s1 = inlined_call_operand.hbm [shape: f32[7,128], index: 1, kind: input, shape index: {}]
  %s2 = inlined_call_operand.hbm [shape: f32[8,7], index: 2, kind: input, shape index: {}]
  %s3 = inlined_call_operand.vmem [shape: f32[8,8], index: 3, kind: input, shape index: {}]
  %s4 = inlined_call_operand.hbm [shape: f32[1,128], index: 4, kind: output, shape index: {}]
  %s5 = sld [smem:[#allocation0]]
  $region30: #{tpu_custom_call.1} parent=0
    _
  %s7 = ssub.s32 1, %s5
  %s8 = scalar_select 0, %s7, %s5
  %10 = dma.hbm_to_smem %s0, 16, [#allocation3], [#allocation2]
  %11 = dma.done [#allocation2], 16
  %12 = sfence
  $region1: #{tpu_custom_call.1} parent=0
    #allocation4 [shape = 'u8[4096]{0}', space=vmem, size = 0x1000, scoped, tag = 'input window, operand 1, single buffered']
    #allocation5 [shape = 's32[1]{0}', space=sflag, size = 0x4, scoped, tag = 'scoped memory for tpu_custom_call.1']
    #allocation6 [shape = 's32[1]{0}', space=sflag, size = 0x4, scoped, tag = 'scoped memory for tpu_custom_call.1']
    #allocation7 [shape = 'u8[4096]{0}', space=vmem, size = 0x1000, scoped, tag = 'input window, operand 2, single buffered']
    #allocation8 [shape = 's32[1]{0}', space=sflag, size = 0x4, scoped, tag = 'scoped memory for tpu_custom_call.1']
    #allocation9 [shape = 'u8[512]{0}', space=vmem, size = 0x400, scoped, tag = 'output window, operand 0, single buffered']
    %13 = vsyncpa [#allocation5], 0
    %14 = vsyncpa [#allocation8], 0
    %15 = vsyncpa [#allocation6], 0
    // Predicated region
    $region2: #{tpu_custom_call.1} parent=1 // pred_check
      _
    $region3: #{tpu_custom_call.1} parent=1 // pred_check_branch
      %17 = sbr.rel (0) target = $region5
    $region4: #{tpu_custom_call.1} parent=1 // pred_region
      %s19 = ssub.s32 128, 128
      %20 = vsyncadd [#allocation5], %s19
      %s22 = sshll.u32 [#allocation4], 4
      %s23 = int_to_ptr.vmem [resolvable:$true] %s22
      %25 = dma.hbm_to_vmem [thread:$0]  %s1, 128, %s23, [#allocation5]
    $region5: #{tpu_custom_call.1} parent=1 // pred_fallthru
      _
    // Predicated region
    $region6: #{tpu_custom_call.1} parent=1 // pred_check
      _
    $region7: #{tpu_custom_call.1} parent=1 // pred_check_branch
      %27 = sbr.rel (0) target = $region9
    $region8: #{tpu_custom_call.1} parent=1 // pred_region
      %s29 = ssub.s32 128, 128
      %30 = vsyncadd [#allocation8], %s29
      %s32 = sshll.u32 [#allocation7], 4
      %s33 = int_to_ptr.vmem [resolvable:$true] %s32
      %35 = dma.hbm_to_vmem [thread:$0]  %s2, 128, %s33, [#allocation8]
    $region9: #{tpu_custom_call.1} parent=1 // pred_fallthru
      _
    // Predicated region
    $region10: #{tpu_custom_call.1} parent=1 // pred_check
      _
    $region11: #{tpu_custom_call.1} parent=1 // pred_check_branch
      %37 = sbr.rel (0) target = $region13
    $region12: #{tpu_custom_call.1} parent=1 // pred_region
      _
    $region13: #{tpu_custom_call.1} parent=1 // pred_fallthru
      _
    // Predicated region
    $region14: #{tpu_custom_call.1} parent=1 // pred_check
      _
    $region15: #{tpu_custom_call.1} parent=1 // pred_check_branch
      %39 = sbr.rel (0) target = $region17
    $region16: #{tpu_custom_call.1} parent=1 // pred_region
      %40 = dma.done [#allocation5], 128
    $region17: #{tpu_custom_call.1} parent=1 // pred_fallthru
      _
    // Predicated region
    $region18: #{tpu_custom_call.1} parent=1 // pred_check
      _
    $region19: #{tpu_custom_call.1} parent=1 // pred_check_branch
      %42 = sbr.rel (0) target = $region21
    $region20: #{tpu_custom_call.1} parent=1 // pred_region
      %43 = dma.done [#allocation8], 128
    $region21: #{tpu_custom_call.1} parent=1 // pred_fallthru
      _
    %s44 = sld [smem:[#allocation3]]
    %s45 = sld [smem:[#allocation3 + $0x1]]
    %v46 = vld [vmem:[#allocation4] sm:$0x7f]
    %v47 = vld [vmem:[#allocation7] sm:$0xff]
    %v48 = vld [vmem:[%s3] sm:$0xff]
    %v49 = vlaneseq
    %v50 = vshrl.u32 %v49, 7
    %v51 = vsub.s32 0, %v50
    %v52 = vrot.slane %v46, %v51
    %54 = vset.pattern.permute.xlu0 0
    %55 = vperm.xlu0 %54, %v47
    %v56 = vpop.permute.xlu0 %55
    %v58 = vmax.f32 %v52, %v56
    %v59 = vlaneseq
    %v60 = vshrl.u32 %v59, 7
    %v61 = vsub.s32 1, %v60
    %v62 = vrot.slane %v46, %v61
    %63 = vset.pattern.permute.xlu0 1
    %64 = vperm.xlu0 %63, %v47
    %v65 = vpop.permute.xlu0 %64
    %v67 = vmax.f32 %v62, %v65
    %v68 = vlaneseq
    %v69 = vshrl.u32 %v68, 7
    %v70 = vsub.s32 2, %v69
    %v71 = vrot.slane %v46, %v70
    %72 = vset.pattern.permute.xlu0 2
    %73 = vperm.xlu0 %72, %v47
    %v74 = vpop.permute.xlu0 %73
    %v76 = vmin.f32 %v71, %v74
    %v77 = vlaneseq
    %v78 = vshrl.u32 %v77, 7
    %v79 = vsub.s32 3, %v78
    %v80 = vrot.slane %v46, %v79
    %81 = vset.pattern.permute.xlu0 3
    %82 = vperm.xlu0 %81, %v47
    %v83 = vpop.permute.xlu0 %82
    %v85 = vmin.f32 %v80, %v83
    %v86 = vsub.f32 %v76, %v58
    %v87 = vadd.f32 %v86, 1.0
    %v88 = vmax.f32 %v87, 0.0
    %v89 = vsub.f32 %v85, %v67
    %v90 = vadd.f32 %v89, 1.0
    %v91 = vmax.f32 %v90, 0.0
    %v92 = vmul.f32 %v88, %v91
    %v94 = vrot.slane %v46, 6
    %v96 = vsub.f32 %v46, %v94
    %v97 = vadd.f32 %v96, 1.0
    %v99 = vrot.slane %v97, 1
    %v101 = vmul.f32 %v97, %v99
    %102 = vrot.lane.b32.xlu0 %v47, 2
    %v103 = vpop.permute.xlu0 %102
    %v105 = vsub.f32 %v47, %v103
    %v106 = vadd.f32 %v105, 1.0
    %108 = vrot.lane.b32.xlu0 %v106, 127
    %v109 = vpop.permute.xlu0 %108
    %v111 = vmul.f32 %v106, %v109
    %v112 = vlaneseq
    %v113 = vshrl.u32 %v112, 7
    %v114 = vmul.f32 %v92, 3.0
    %v115 = vlaneseq
    %v116 = vshrl.u32 %v115, 7
    %v117 = vsub.s32 2, %v116
    %v118 = vrot.slane %v101, %v117
    %120 = vset.pattern.permute.xlu0 2
    %121 = vperm.xlu0 %120, %v111
    %v122 = vpop.permute.xlu0 %121
    %v124 = vadd.f32 %v118, %v122
    %vm125 = vcmp.gt.f32.partialorder %v114, %v124
    %v126 = vlaneseq
    %v127 = vshrl.u32 %v126, 7
    %v128 = vsub.s32 6, %v127
    %v129 = vrot.slane %v46, %v128
    %130 = vset.pattern.permute.xlu0 6
    %131 = vperm.xlu0 %130, %v47
    %v132 = vpop.permute.xlu0 %131
    %vm134 = vcmp.eq.f32.partialorder %v129, %v132
    %vm135 = vmand %vm125, %vm134
    %v136 = vstv %s45
    %vm137 = vcmp.lt.s32.totalorder %v113, %v136
    %vm138 = vmand %vm135, %vm137
    %v139 = vsel %vm138, %v113, 8
    %v140 = vrot.slane %v139, 4
    %vm141 = vcmp.lt.s32.totalorder %v139, %v140
    %v142 = vsel %vm141, %v139, %v140
    %v143 = vrot.slane %v142, 2
    %vm144 = vcmp.lt.s32.totalorder %v142, %v143
    %v145 = vsel %vm144, %v142, %v143
    %v146 = vrot.slane %v145, 1
    %vm147 = vcmp.lt.s32.totalorder %v145, %v146
    %v148 = vsel %vm147, %v145, %v146
    %vm149 = vcmp.lt.s32.totalorder %v148, 8
    %vm150 = vcmp.eq.s32.totalorder %v113, %v148
    %v151 = vsel %vm150, 1, 0
    %v152 = vcvt.s32.f32 %v151
    %vm153 = vcmask 64512
    %v155 = vsel %vm153, %v48, 0
    %157 = vmatprep.subr.mxu0 0.0
    %158 = vmatpush1.msra.mxu0 %v152
    %159 = vmatprep.subr.mxu0 0.0
    %160 = vmatpush1.msra.mxu0 0.0
    %161 = vmatprep.subr.mxu0 0.0
    %162 = vmatpush1.msra.mxu0 0.0
    %163 = vmatprep.subr.mxu0 0.0
    %164 = vmatpush1.msra.mxu0 0.0
    %165 = vmatprep.subr.mxu0 0.0
    %166 = vmatpush1.msra.mxu0 0.0
    %167 = vmatprep.subr.mxu0 0.0
    %168 = vmatpush1.msra.mxu0 0.0
    %169 = vmatprep.subr.mxu0 0.0
    %170 = vmatpush1.msra.mxu0 0.0
    %171 = vmatprep.subr.mxu0 0.0
    %172 = vmatpush1.msra.mxu0 0.0
    %173 = vmatprep.subr.mxu0 0.0
    %174 = vmatpush1.msra.mxu0 0.0
    %175 = vmatprep.subr.mxu0 0.0
    %176 = vmatpush1.msra.mxu0 0.0
    %177 = vmatprep.subr.mxu0 0.0
    %178 = vmatpush1.msra.mxu0 0.0
    %179 = vmatprep.subr.mxu0 0.0
    %180 = vmatpush1.msra.mxu0 0.0
    %181 = vmatprep.subr.mxu0 0.0
    %182 = vmatpush1.msra.mxu0 0.0
    %183 = vmatprep.subr.mxu0 0.0
    %184 = vmatpush1.msra.mxu0 0.0
    %185 = vmatprep.subr.mxu0 0.0
    %186 = vmatpush1.msra.mxu0 0.0
    %187 = vmatprep.subr.mxu0 0.0
    %188 = vmatpush1.msra.mxu0 0.0
    %189 = vmatprep.subr.mxu0 0.0
    %190 = vmatpush1.msra.mxu0 0.0
    %191 = vmatprep.subr.mxu0 0.0
    %192 = vmatpush1.msra.mxu0 0.0
    %193 = vmatprep.subr.mxu0 0.0
    %194 = vmatpush1.msra.mxu0 0.0
    %195 = vmatprep.subr.mxu0 0.0
    %196 = vmatpush1.msra.mxu0 0.0
    %197 = vmatprep.subr.mxu0 0.0
    %198 = vmatpush1.msra.mxu0 0.0
    %199 = vmatprep.subr.mxu0 0.0
    %200 = vmatpush1.msra.mxu0 0.0
    %201 = vmatprep.subr.mxu0 0.0
    %202 = vmatpush1.msra.mxu0 0.0
    %203 = vmatprep.subr.mxu0 0.0
    %204 = vmatpush1.msra.mxu0 0.0
    %205 = vmatprep.subr.mxu0 0.0
    %206 = vmatpush1.msra.mxu0 0.0
    %207 = vmatprep.subr.mxu0 0.0
    %208 = vmatpush1.msra.mxu0 0.0
    %209 = vmatprep.subr.mxu0 0.0
    %210 = vmatpush1.msra.mxu0 0.0
    %211 = vmatprep.subr.mxu0 0.0
    %212 = vmatpush1.msra.mxu0 0.0
    %213 = vmatprep.subr.mxu0 0.0
    %214 = vmatpush1.msra.mxu0 0.0
    %215 = vmatprep.subr.mxu0 0.0
    %216 = vmatpush1.msra.mxu0 0.0
    %217 = vmatprep.subr.mxu0 0.0
    %218 = vmatpush1.msra.mxu0 0.0
    %219 = vmatprep.subr.mxu0 0.0
    %220 = vmatpush1.msra.mxu0 0.0
    %221 = vmatprep.mubr.f32.mxu0 0.0
    %222 = vmatmul.mubr.f32.gmra.mrb[0].mxu0 %v155
    %v223 = vpop.f32.mrb[0].mxu0
    %v224 = vadd.f32 0.0, %v223
    %v225 = vpop.f32.mrb[0].mxu0
    %226 = vdwg.mxu0
    %v227 = vsub.f32 %v46, %v224
    %v228 = vand.u32 2147483647, %v227
    %vm229 = vcmp.lt.f32.partialorder %v228, 1.0
    %v230 = vmul.f32 %v227, 0.5
    %v231 = vmul.f32 %v230, %v227
    %v232 = vsub.f32 %v228, 0.5
    %v233 = vsel %vm229, %v231, %v232
    %vm234 = vcmask 1043456
    %v235 = vsel %vm234, %v233, 0.0
    %v236 = vrot.slane %v235, 4
    %v237 = vadd.f32 %v235, %v236
    %v238 = vrot.slane %v237, 2
    %v239 = vadd.f32 %v237, %v238
    %v240 = vrot.slane %v239, 1
    %v241 = vadd.f32 %v239, %v240
    %v242 = vmul.f32 %v241, 0.25
    %v243 = vsub.f32 1.0, %v46
    %v244 = vsel %vm149, %v46, %v243
    %v245 = vsel %vm149, %v242, 0.0
    %v246 = vlog2.pop %v244
    %v247 = vmul.f32 %v246, 0.6931472
    %v248 = vsub.f32 %v245, %v247
    %v249 = vlaneseq
    %v250 = vand.u32 %v249, 127
    %s251 = smul.u32 0, 128
    %v252 = vstv %s251
    %v253 = vadd.s32 %v252, %v250
    %v254 = vstv %s44
    %vm255 = vcmp.lt.s32.totalorder %v253, %v254
    %v256 = vsel %vm255, %v248, 0.0
    %257 = vst [vmem:[#allocation9 - $0x4] sm:$0x10] %v256
    // Predicated region
    $region22: #{tpu_custom_call.1} parent=1 // pred_check
      _
    $region23: #{tpu_custom_call.1} parent=1 // pred_check_branch
      %259 = sbr.rel (0) target = $region25
    $region24: #{tpu_custom_call.1} parent=1 // pred_region
      %s261 = ssub.s32 16, 16
      %262 = vsyncadd [#allocation6], %s261
      %s264 = sshll.u32 [#allocation9], 4
      %s265 = int_to_ptr.vmem [resolvable:$true] %s264
      %267 = dma.vmem_to_hbm [thread:$0]  %s265, 16, %s4, [#allocation6]
    $region25: #{tpu_custom_call.1} parent=1 // pred_fallthru
      _
    // Predicated region
    $region26: #{tpu_custom_call.1} parent=1 // pred_check
      _
    $region27: #{tpu_custom_call.1} parent=1 // pred_check_branch
      %269 = sbr.rel (0) target = $region29
    $region28: #{tpu_custom_call.1} parent=1 // pred_region
      %270 = dma.done [#allocation6], 16
    $region29: #{tpu_custom_call.1} parent=1 // pred_fallthru
      _
    %271 = vsyncpa [#allocation5], 1
    %272 = vsyncpa [#allocation8], 1
    %273 = vsyncpa [#allocation6], 1

</llo_original>
